<compile_context>
chip_gen: v7x
topology: tpu7x:2x2x1
jax: 0.10.0
libtpu: 0.0.40
codegen_flags: <defaults>
</compile_context>

<pallas_src>
import functools

import jax
import jax.numpy as jnp
from jax.experimental import pallas as pl
from jax.experimental.pallas import tpu as pltpu


def _maxpool_kernel(x_ref, o_ref, *, k, s, ho, wo):
    # x_ref: (hpad, wpad, CB)  max-identity padded, channels-last block
    # o_ref: (ho, wo, CB)
    #
    # Tap (kh, kw) of the pooling window is the strided slice
    #   x_pad[kh + i*s, kw + j*s, c]   (i < ho, j < wo)
    # H stride = addressing on the untiled dim, W stride = sublane-strided
    # load, lanes (channels) stay dense.  Pure VPU maxima; single cast at the
    # store (no dtype round trips).
    acc = None
    for kh in range(k):
        for kw in range(k):
            win = x_ref[pl.ds(kh, ho, stride=s),
                        pl.ds(kw, wo, stride=s), :]          # (ho, wo, CB)
            acc = win if acc is None else jnp.maximum(acc, win)
    o_ref[...] = acc.astype(o_ref.dtype)


def _device_info():
    """(min_steps, target_bytes, vmem_capacity) tuned per TPU generation."""
    try:
        kind = jax.devices()[0].device_kind.lower()
    except Exception:
        kind = ""
    single_tc = any(t in kind for t in ("v2", "v3", "v4", "v5", "v6"))
    try:
        vmem_cap = int(pltpu.get_tpu_info().vmem_capacity_bytes)
    except Exception:
        vmem_cap = (128 if single_tc else 64) * 1024 * 1024
    if single_tc:
        # 1 TensorCore/chip: no need for many grid steps; bigger DMAs win.
        return 1, 6 << 20, vmem_cap
    # v7x-like (2 TC/chip, 64 MiB VMEM): keep >=2 parallel steps, smaller blocks.
    return 2, 3 << 20, vmem_cap


def _choose_channel_block(nc, in_bytes_per_ch, out_bytes_per_ch,
                          min_steps, target_bytes, vmem_cap):
    """Lane-dim (channel) block size: multiple of 128 or the full dim.

    Targets ~target_bytes per input block, keeps >=min_steps grid steps when
    there are enough channels (multi-TC sharding), and caps the
    double-buffered in+out footprint at ~60% of VMEM.
    """
    if nc < 128:
        # Full (tiny) lane dim.  Padding channels up to 128 would give
        # unmasked stores but multiplies HBM traffic, which dominates this
        # memory-bound op -- so we keep the small lane dim (review item).
        return nc
    by_bytes = max(1, target_bytes // (in_bytes_per_ch * 128))
    by_steps = max(1, nc // (min_steps * 128))
    by_vmem = max(1, int(0.6 * vmem_cap)
                  // (2 * (in_bytes_per_ch + out_bytes_per_ch) * 128))
    blocks = int(min(by_bytes, by_steps, by_vmem))
    return min(nc, max(1, blocks) * 128)


@functools.partial(jax.jit, static_argnums=(1, 2, 3))
def maxpool2d(x, k_size, stride, padding):
    """Equivalent of nn.MaxPool2d(k_size, stride, padding) on NCHW input."""
    n, c, h, w = x.shape
    k, s, p = k_size, stride, padding
    nc = n * c
    ho = (h + 2 * p - k) // s + 1          # floor mode (PyTorch default)
    wo = (w + 2 * p - k) // s + 1
    hpad, wpad = h + 2 * p, w + 2 * p

    if jnp.issubdtype(x.dtype, jnp.floating):
        neg = float("-inf")
    else:
        neg = int(jnp.iinfo(x.dtype).min)

    # --- single wrapper-side input materialization (fused under jit):
    # NCHW -> channels-last + max-identity border pad.  No phase split.
    xt = jnp.transpose(x.reshape(nc, h, w), (1, 2, 0))            # (h, w, nc)
    xp = jnp.pad(xt, ((p, p), (p, p), (0, 0)), constant_values=neg)

    itemsize = jnp.dtype(x.dtype).itemsize
    min_steps, target_bytes, vmem_cap = _device_info()
    cb = _choose_channel_block(nc,
                               hpad * wpad * itemsize,
                               ho * wo * itemsize,
                               min_steps, target_bytes, vmem_cap)
    grid = (pl.cdiv(nc, cb),)
    # Note: when nc % cb != 0 the last block reads a few out-of-bounds lanes;
    # this is benign (those output lanes are discarded by Pallas).

    # VMEM limit from the actual double-buffered block footprint (+ slack),
    # capped at the reported capacity (tighter than a fixed 48 MiB on v7x).
    need = 2 * (hpad * wpad + ho * wo) * cb * itemsize
    vmem_limit = int(min(max(need + (8 << 20), 32 << 20), vmem_cap))

    kernel = functools.partial(_maxpool_kernel, k=k, s=s, ho=ho, wo=wo)
    out = pl.pallas_call(
        kernel,
        out_shape=jax.ShapeDtypeStruct((ho, wo, nc), x.dtype),
        grid=grid,
        # Last two block dims are either full array dims or 128-multiples,
        # so the (8, 128) tiling rules hold.
        in_specs=[pl.BlockSpec((hpad, wpad, cb), lambda i: (0, 0, i))],
        out_specs=pl.BlockSpec((ho, wo, cb), lambda i: (0, 0, i)),
        compiler_params=pltpu.CompilerParams(
            dimension_semantics=("parallel",),
            vmem_limit_bytes=vmem_limit),
    )(xp)

    # channels-last -> NCHW (module contract).
    # TODO(synk): keep channels-last for the consumer / fuse into the next op
    # to drop this extra output-sized round trip (~25% traffic at s=2).
    return jnp.transpose(out, (2, 0, 1)).reshape(n, c, ho, wo)


def _reference(x, k_size, stride, padding):
    init = (-jnp.inf if jnp.issubdtype(x.dtype, jnp.floating)
            else jnp.iinfo(x.dtype).min)
    return jax.lax.reduce_window(
        x, jnp.array(init, x.dtype), jax.lax.max,
        window_dimensions=(1, 1, k_size, k_size),
        window_strides=(1, 1, stride, stride),
        padding=[(0, 0), (0, 0), (padding, padding), (padding, padding)])


if __name__ == "__main__":
    # Maxpool(k_size=3, stride=2, padding=1) -- no weights to construct.
    k_size, stride, padding = 3, 2, 1
    key = jax.random.PRNGKey(0)

    # Primary test: f32, even spatial dims, small channels (full-dim lanes).
    x = jax.random.normal(key, (2, 4, 16, 16), dtype=jnp.float32)
    y = jax.block_until_ready(maxpool2d(x, k_size, stride, padding))
    ref = _reference(x, k_size, stride, padding)
    assert y.shape == ref.shape == (2, 4, 8, 8), y.shape
    assert jnp.array_equal(y, ref), "f32 mismatch vs reduce_window reference"

    # Secondary test: odd spatial dims (other h+2p parity), tiny channel count.
    x2 = jax.random.normal(key, (1, 3, 15, 15), dtype=jnp.float32)
    y2 = jax.block_until_ready(maxpool2d(x2, k_size, stride, padding))
    ref2 = _reference(x2, k_size, stride, padding)
    assert y2.shape == ref2.shape, y2.shape
    assert jnp.array_equal(y2, ref2), "odd-size mismatch vs reference"

    # Third test: nc >= 128 and not a multiple of the 128-lane block
    # (exercises the multi-step parallel grid and the partial last block).
    x3 = jax.random.normal(key, (2, 96, 16, 16), dtype=jnp.float32)
    y3 = jax.block_until_ready(maxpool2d(x3, k_size, stride, padding))
    ref3 = _reference(x3, k_size, stride, padding)
    assert y3.shape == ref3.shape == (2, 96, 8, 8), y3.shape
    assert jnp.array_equal(y3, ref3), "large-nc mismatch vs reference"

    print("KERNEL_OK")
</pallas_src>

<mosaic_0001>
module attributes {stable_mosaic.version = 11 : i64} {
  func.func @_maxpool_kernel(%arg0: i32, %arg1: memref<18x18x8xf32, #tpu.memory_space<vmem>>, %arg2: memref<8x8x8xf32, #tpu.memory_space<vmem>>) attributes {dimension_semantics = [#tpu.dimension_semantics<parallel>], iteration_bounds = array<i64: 1>, scalar_prefetch = 0 : i64, scratch_operands = 0 : i64, tpu.core_type = #tpu.core_type<tc>, window_params = [{transform_indices = @transform_0, window_bounds = array<i64: 18, 18, 8>}, {transform_indices = @transform_1, window_bounds = array<i64: 8, 8, 8>}]} {
    %c0 = arith.constant 0 : index
    %c0_0 = arith.constant 0 : index
    %c0_1 = arith.constant 0 : index
    %0 = tpu.strided_load %arg1[%c0, %c0_0, %c0_1] {strides = array<i32: 2, 2, 1>} : memref<18x18x8xf32, #tpu.memory_space<vmem>>, vector<8x8x8xf32>
    %c0_2 = arith.constant 0 : index
    %c1 = arith.constant 1 : index
    %c0_3 = arith.constant 0 : index
    %1 = tpu.strided_load %arg1[%c0_2, %c1, %c0_3] {strides = array<i32: 2, 2, 1>} : memref<18x18x8xf32, #tpu.memory_space<vmem>>, vector<8x8x8xf32>
    %2 = arith.maximumf %0, %1 : vector<8x8x8xf32>
    %c0_4 = arith.constant 0 : index
    %c2 = arith.constant 2 : index
    %c0_5 = arith.constant 0 : index
    %3 = tpu.strided_load %arg1[%c0_4, %c2, %c0_5] {strides = array<i32: 2, 2, 1>} : memref<18x18x8xf32, #tpu.memory_space<vmem>>, vector<8x8x8xf32>
    %4 = arith.maximumf %2, %3 : vector<8x8x8xf32>
    %c1_6 = arith.constant 1 : index
    %c0_7 = arith.constant 0 : index
    %c0_8 = arith.constant 0 : index
    %5 = tpu.strided_load %arg1[%c1_6, %c0_7, %c0_8] {strides = array<i32: 2, 2, 1>} : memref<18x18x8xf32, #tpu.memory_space<vmem>>, vector<8x8x8xf32>
    %6 = arith.maximumf %4, %5 : vector<8x8x8xf32>
    %c1_9 = arith.constant 1 : index
    %c1_10 = arith.constant 1 : index
    %c0_11 = arith.constant 0 : index
    %7 = tpu.strided_load %arg1[%c1_9, %c1_10, %c0_11] {strides = array<i32: 2, 2, 1>} : memref<18x18x8xf32, #tpu.memory_space<vmem>>, vector<8x8x8xf32>
    %8 = arith.maximumf %6, %7 : vector<8x8x8xf32>
    %c1_12 = arith.constant 1 : index
    %c2_13 = arith.constant 2 : index
    %c0_14 = arith.constant 0 : index
    %9 = tpu.strided_load %arg1[%c1_12, %c2_13, %c0_14] {strides = array<i32: 2, 2, 1>} : memref<18x18x8xf32, #tpu.memory_space<vmem>>, vector<8x8x8xf32>
    %10 = arith.maximumf %8, %9 : vector<8x8x8xf32>
    %c2_15 = arith.constant 2 : index
    %c0_16 = arith.constant 0 : index
    %c0_17 = arith.constant 0 : index
    %11 = tpu.strided_load %arg1[%c2_15, %c0_16, %c0_17] {strides = array<i32: 2, 2, 1>} : memref<18x18x8xf32, #tpu.memory_space<vmem>>, vector<8x8x8xf32>
    %12 = arith.maximumf %10, %11 : vector<8x8x8xf32>
    %c2_18 = arith.constant 2 : index
    %c1_19 = arith.constant 1 : index
    %c0_20 = arith.constant 0 : index
    %13 = tpu.strided_load %arg1[%c2_18, %c1_19, %c0_20] {strides = array<i32: 2, 2, 1>} : memref<18x18x8xf32, #tpu.memory_space<vmem>>, vector<8x8x8xf32>
    %14 = arith.maximumf %12, %13 : vector<8x8x8xf32>
    %c2_21 = arith.constant 2 : index
    %c2_22 = arith.constant 2 : index
    %c0_23 = arith.constant 0 : index
    %15 = tpu.strided_load %arg1[%c2_21, %c2_22, %c0_23] {strides = array<i32: 2, 2, 1>} : memref<18x18x8xf32, #tpu.memory_space<vmem>>, vector<8x8x8xf32>
    %16 = arith.maximumf %14, %15 : vector<8x8x8xf32>
    %c0_24 = arith.constant 0 : index
    %c0_25 = arith.constant 0 : index
    %c0_26 = arith.constant 0 : index
    %17 = vector.load %arg2[%c0_24, %c0_25, %c0_26] : memref<8x8x8xf32, #tpu.memory_space<vmem>>, vector<8x8x8xf32>
    tpu.vector_store %arg2[%c0_24, %c0_25, %c0_26], %16 {strides = array<i32>} : memref<8x8x8xf32, #tpu.memory_space<vmem>>, vector<8x8x8xf32>,
    return
  }
  func.func @transform_0(%arg0: i32) -> (i32, i32, i32) {
    %c0_i32 = arith.constant 0 : i32
    %c0_i32_0 = arith.constant 0 : i32
    %c0_i32_1 = arith.constant 0 : i32
    return %c0_i32, %c0_i32_0, %arg0 : i32, i32, i32
  }
  func.func @transform_1(%arg0: i32) -> (i32, i32, i32) {
    %c0_i32 = arith.constant 0 : i32
    %c0_i32_0 = arith.constant 0 : i32
    %c0_i32_1 = arith.constant 0 : i32
    return %c0_i32, %c0_i32_0, %arg0 : i32, i32, i32
  }
}

</mosaic_0001>

<llo_original>
// kernel: maxpool2d.1
$region0: #{maxpool2d.1}
  #allocation0 [shape = 'u32[]', space=smem, size = 0x4, offset = 0x4, fixed_abs, tag = 'smem constant byte address 0x4 - core index']
  #allocation1 [shape = 'u32[144,128]{1,0:T(1,128)}', space=vmem, size = 0x12000, scoped, tag = 'internal scratch']
  %s0 = inlined_call_operand.vmem [shape: f32[18,18,8], index: 0, kind: input, shape index: {}]
  %s1 = inlined_call_operand.vmem [shape: f32[8,8,8], index: 1, kind: output, shape index: {}]
  %s2 = sld [smem:[#allocation0]]
  $region14: #{maxpool2d.1} parent=0
    _
  %s4 = ssub.s32 1, %s2
  %s5 = scalar_select 0, %s4, %s2
  // Predicated region
  $region2: #{maxpool2d.1} parent=0 // pred_check
    _
  $region3: #{maxpool2d.1} parent=0 // pred_check_branch
    %7 = sbr.rel (0) target = $region5
  $region4: #{maxpool2d.1} parent=0 // pred_region
    _
  $region5: #{maxpool2d.1} parent=0 // pred_fallthru
    _
  %v8 = vld [vmem:[%s0] ss:$2 sm:$0xff]
  %s9 = scalar_lea.vmem %s0, 48
  %v10 = vld [vmem:[%s9] ss:$2 sm:$0xff]
  %s11 = scalar_lea.vmem %s0, 96
  %v12 = vld [vmem:[%s11] ss:$2 sm:$0xff]
  %s13 = scalar_lea.vmem %s0, 144
  %v14 = vld [vmem:[%s13] ss:$2 sm:$0xff]
  %s15 = scalar_lea.vmem %s0, 192
  %v16 = vld [vmem:[%s15] ss:$2 sm:$0xff]
  %s17 = scalar_lea.vmem %s0, 240
  %v18 = vld [vmem:[%s17] ss:$2 sm:$0xff]
  %s19 = scalar_lea.vmem %s0, 288
  %v20 = vld [vmem:[%s19] ss:$2 sm:$0xff]
  %s21 = scalar_lea.vmem %s0, 336
  %v22 = vld [vmem:[%s21] ss:$2 sm:$0xff]
  %s23 = scalar_lea.vmem %s0, 1
  %v24 = vld [vmem:[%s23] ss:$2 sm:$0xff]
  %s25 = scalar_lea.vmem %s0, 49
  %v26 = vld [vmem:[%s25] ss:$2 sm:$0xff]
  %s27 = scalar_lea.vmem %s0, 97
  %v28 = vld [vmem:[%s27] ss:$2 sm:$0xff]
  %s29 = scalar_lea.vmem %s0, 145
  %v30 = vld [vmem:[%s29] ss:$2 sm:$0xff]
  %s31 = scalar_lea.vmem %s0, 193
  %v32 = vld [vmem:[%s31] ss:$2 sm:$0xff]
  %s33 = scalar_lea.vmem %s0, 241
  %v34 = vld [vmem:[%s33] ss:$2 sm:$0xff]
  %s35 = scalar_lea.vmem %s0, 289
  %v36 = vld [vmem:[%s35] ss:$2 sm:$0xff]
  %s37 = scalar_lea.vmem %s0, 337
  %v38 = vld [vmem:[%s37] ss:$2 sm:$0xff]
  %v39 = vmax.f32 %v8, %v24
  %v40 = vmax.f32 %v10, %v26
  %v41 = vmax.f32 %v12, %v28
  %v42 = vmax.f32 %v14, %v30
  %v43 = vmax.f32 %v16, %v32
  %v44 = vmax.f32 %v18, %v34
  %v45 = vmax.f32 %v20, %v36
  %v46 = vmax.f32 %v22, %v38
  %s47 = scalar_lea.vmem %s0, 2
  %v48 = vld [vmem:[%s47] ss:$2 sm:$0xff]
  %s49 = scalar_lea.vmem %s0, 50
  %v50 = vld [vmem:[%s49] ss:$2 sm:$0xff]
  %s51 = scalar_lea.vmem %s0, 98
  %v52 = vld [vmem:[%s51] ss:$2 sm:$0xff]
  %s53 = scalar_lea.vmem %s0, 146
  %v54 = vld [vmem:[%s53] ss:$2 sm:$0xff]
  %s55 = scalar_lea.vmem %s0, 194
  %v56 = vld [vmem:[%s55] ss:$2 sm:$0xff]
  %s57 = scalar_lea.vmem %s0, 242
  %v58 = vld [vmem:[%s57] ss:$2 sm:$0xff]
  %s59 = scalar_lea.vmem %s0, 290
  %v60 = vld [vmem:[%s59] ss:$2 sm:$0xff]
  %s61 = scalar_lea.vmem %s0, 338
  %v62 = vld [vmem:[%s61] ss:$2 sm:$0xff]
  %v63 = vmax.f32 %v39, %v48
  %v64 = vmax.f32 %v40, %v50
  %v65 = vmax.f32 %v41, %v52
  %v66 = vmax.f32 %v42, %v54
  %v67 = vmax.f32 %v43, %v56
  %v68 = vmax.f32 %v44, %v58
  %v69 = vmax.f32 %v45, %v60
  %v70 = vmax.f32 %v46, %v62
  %s71 = scalar_lea.vmem %s0, 24
  %v72 = vld [vmem:[%s71] ss:$2 sm:$0xff]
  %s73 = scalar_lea.vmem %s71, 48
  %v74 = vld [vmem:[%s73] ss:$2 sm:$0xff]
  %s75 = scalar_lea.vmem %s71, 96
  %v76 = vld [vmem:[%s75] ss:$2 sm:$0xff]
  %s77 = scalar_lea.vmem %s71, 144
  %v78 = vld [vmem:[%s77] ss:$2 sm:$0xff]
  %s79 = scalar_lea.vmem %s71, 192
  %v80 = vld [vmem:[%s79] ss:$2 sm:$0xff]
  %s81 = scalar_lea.vmem %s71, 240
  %v82 = vld [vmem:[%s81] ss:$2 sm:$0xff]
  %s83 = scalar_lea.vmem %s71, 288
  %v84 = vld [vmem:[%s83] ss:$2 sm:$0xff]
  %s85 = scalar_lea.vmem %s71, 336
  %v86 = vld [vmem:[%s85] ss:$2 sm:$0xff]
  %v87 = vmax.f32 %v63, %v72
  %v88 = vmax.f32 %v64, %v74
  %v89 = vmax.f32 %v65, %v76
  %v90 = vmax.f32 %v66, %v78
  %v91 = vmax.f32 %v67, %v80
  %v92 = vmax.f32 %v68, %v82
  %v93 = vmax.f32 %v69, %v84
  %v94 = vmax.f32 %v70, %v86
  %s95 = scalar_lea.vmem %s71, 1
  %v96 = vld [vmem:[%s95] ss:$2 sm:$0xff]
  %s97 = scalar_lea.vmem %s71, 49
  %v98 = vld [vmem:[%s97] ss:$2 sm:$0xff]
  %s99 = scalar_lea.vmem %s71, 97
  %v100 = vld [vmem:[%s99] ss:$2 sm:$0xff]
  %s101 = scalar_lea.vmem %s71, 145
  %v102 = vld [vmem:[%s101] ss:$2 sm:$0xff]
  %s103 = scalar_lea.vmem %s71, 193
  %v104 = vld [vmem:[%s103] ss:$2 sm:$0xff]
  %s105 = scalar_lea.vmem %s71, 241
  %v106 = vld [vmem:[%s105] ss:$2 sm:$0xff]
  %s107 = scalar_lea.vmem %s71, 289
  %v108 = vld [vmem:[%s107] ss:$2 sm:$0xff]
  %s109 = scalar_lea.vmem %s71, 337
  %v110 = vld [vmem:[%s109] ss:$2 sm:$0xff]
  %v111 = vmax.f32 %v87, %v96
  %v112 = vmax.f32 %v88, %v98
  %v113 = vmax.f32 %v89, %v100
  %v114 = vmax.f32 %v90, %v102
  %v115 = vmax.f32 %v91, %v104
  %v116 = vmax.f32 %v92, %v106
  %v117 = vmax.f32 %v93, %v108
  %v118 = vmax.f32 %v94, %v110
  %s119 = scalar_lea.vmem %s71, 2
  %v120 = vld [vmem:[%s119] ss:$2 sm:$0xff]
  %s121 = scalar_lea.vmem %s71, 50
  %v122 = vld [vmem:[%s121] ss:$2 sm:$0xff]
  %s123 = scalar_lea.vmem %s71, 98
  %v124 = vld [vmem:[%s123] ss:$2 sm:$0xff]
  %s125 = scalar_lea.vmem %s71, 146
  %v126 = vld [vmem:[%s125] ss:$2 sm:$0xff]
  %s127 = scalar_lea.vmem %s71, 194
  %v128 = vld [vmem:[%s127] ss:$2 sm:$0xff]
  %s129 = scalar_lea.vmem %s71, 242
  %v130 = vld [vmem:[%s129] ss:$2 sm:$0xff]
  %s131 = scalar_lea.vmem %s71, 290
  %v132 = vld [vmem:[%s131] ss:$2 sm:$0xff]
  %s133 = scalar_lea.vmem %s71, 338
  %v134 = vld [vmem:[%s133] ss:$2 sm:$0xff]
  %v135 = vmax.f32 %v111, %v120
  %v136 = vmax.f32 %v112, %v122
  %v137 = vmax.f32 %v113, %v124
  %v138 = vmax.f32 %v114, %v126
  %v139 = vmax.f32 %v115, %v128
  %v140 = vmax.f32 %v116, %v130
  %v141 = vmax.f32 %v117, %v132
  %v142 = vmax.f32 %v118, %v134
  %s143 = scalar_lea.vmem %s0, 48
  %v144 = vld [vmem:[%s143] ss:$2 sm:$0xff]
  %s145 = scalar_lea.vmem %s143, 48
  %v146 = vld [vmem:[%s145] ss:$2 sm:$0xff]
  %s147 = scalar_lea.vmem %s143, 96
  %v148 = vld [vmem:[%s147] ss:$2 sm:$0xff]
  %s149 = scalar_lea.vmem %s143, 144
  %v150 = vld [vmem:[%s149] ss:$2 sm:$0xff]
  %s151 = scalar_lea.vmem %s143, 192
  %v152 = vld [vmem:[%s151] ss:$2 sm:$0xff]
  %s153 = scalar_lea.vmem %s143, 240
  %v154 = vld [vmem:[%s153] ss:$2 sm:$0xff]
  %s155 = scalar_lea.vmem %s143, 288
  %v156 = vld [vmem:[%s155] ss:$2 sm:$0xff]
  %s157 = scalar_lea.vmem %s143, 336
  %v158 = vld [vmem:[%s157] ss:$2 sm:$0xff]
  %v159 = vmax.f32 %v135, %v144
  %v160 = vmax.f32 %v136, %v146
  %v161 = vmax.f32 %v137, %v148
  %v162 = vmax.f32 %v138, %v150
  %v163 = vmax.f32 %v139, %v152
  %v164 = vmax.f32 %v140, %v154
  %v165 = vmax.f32 %v141, %v156
  %v166 = vmax.f32 %v142, %v158
  %s167 = scalar_lea.vmem %s143, 1
  %v168 = vld [vmem:[%s167] ss:$2 sm:$0xff]
  %s169 = scalar_lea.vmem %s143, 49
  %v170 = vld [vmem:[%s169] ss:$2 sm:$0xff]
  %s171 = scalar_lea.vmem %s143, 97
  %v172 = vld [vmem:[%s171] ss:$2 sm:$0xff]
  %s173 = scalar_lea.vmem %s143, 145
  %v174 = vld [vmem:[%s173] ss:$2 sm:$0xff]
  %s175 = scalar_lea.vmem %s143, 193
  %v176 = vld [vmem:[%s175] ss:$2 sm:$0xff]
  %s177 = scalar_lea.vmem %s143, 241
  %v178 = vld [vmem:[%s177] ss:$2 sm:$0xff]
  %s179 = scalar_lea.vmem %s143, 289
  %v180 = vld [vmem:[%s179] ss:$2 sm:$0xff]
  %s181 = scalar_lea.vmem %s143, 337
  %v182 = vld [vmem:[%s181] ss:$2 sm:$0xff]
  %v183 = vmax.f32 %v159, %v168
  %v184 = vmax.f32 %v160, %v170
  %v185 = vmax.f32 %v161, %v172
  %v186 = vmax.f32 %v162, %v174
  %v187 = vmax.f32 %v163, %v176
  %v188 = vmax.f32 %v164, %v178
  %v189 = vmax.f32 %v165, %v180
  %v190 = vmax.f32 %v166, %v182
  %s191 = scalar_lea.vmem %s143, 2
  %v192 = vld [vmem:[%s191] ss:$2 sm:$0xff]
  %s193 = scalar_lea.vmem %s143, 50
  %v194 = vld [vmem:[%s193] ss:$2 sm:$0xff]
  %s195 = scalar_lea.vmem %s143, 98
  %v196 = vld [vmem:[%s195] ss:$2 sm:$0xff]
  %s197 = scalar_lea.vmem %s143, 146
  %v198 = vld [vmem:[%s197] ss:$2 sm:$0xff]
  %s199 = scalar_lea.vmem %s143, 194
  %v200 = vld [vmem:[%s199] ss:$2 sm:$0xff]
  %s201 = scalar_lea.vmem %s143, 242
  %v202 = vld [vmem:[%s201] ss:$2 sm:$0xff]
  %s203 = scalar_lea.vmem %s143, 290
  %v204 = vld [vmem:[%s203] ss:$2 sm:$0xff]
  %s205 = scalar_lea.vmem %s143, 338
  %v206 = vld [vmem:[%s205] ss:$2 sm:$0xff]
  %v207 = vmax.f32 %v183, %v192
  %v208 = vmax.f32 %v184, %v194
  %v209 = vmax.f32 %v185, %v196
  %v210 = vmax.f32 %v186, %v198
  %v211 = vmax.f32 %v187, %v200
  %v212 = vmax.f32 %v188, %v202
  %v213 = vmax.f32 %v189, %v204
  %v214 = vmax.f32 %v190, %v206
  %vm215 = vcmask 64512
  %216 = vst.msk [vmem:[%s1] sm:$0xff] %vm215, %v207
  %217 = vst.msk [vmem:[%s1 + $0x8] sm:$0xff] %vm215, %v208
  %218 = vst.msk [vmem:[%s1 + $0x10] sm:$0xff] %vm215, %v209
  %219 = vst.msk [vmem:[%s1 + $0x18] sm:$0xff] %vm215, %v210
  %220 = vst.msk [vmem:[%s1 + $0x20] sm:$0xff] %vm215, %v211
  %221 = vst.msk [vmem:[%s1 + $0x28] sm:$0xff] %vm215, %v212
  %222 = vst.msk [vmem:[%s1 + $0x30] sm:$0xff] %vm215, %v213
  %223 = vst.msk [vmem:[%s1 + $0x38] sm:$0xff] %vm215, %v214
  // Predicated region
  $region6: #{maxpool2d.1} parent=0 // pred_check
    _
  $region7: #{maxpool2d.1} parent=0 // pred_check_branch
    %225 = sbr.rel (0) target = $region9
  $region8: #{maxpool2d.1} parent=0 // pred_region
    _
  $region9: #{maxpool2d.1} parent=0 // pred_fallthru
    _
  // Predicated region
  $region10: #{maxpool2d.1} parent=0 // pred_check
    _
  $region11: #{maxpool2d.1} parent=0 // pred_check_branch
    %227 = sbr.rel (0) target = $region13
  $region12: #{maxpool2d.1} parent=0 // pred_region
    _
  $region13: #{maxpool2d.1} parent=0 // pred_fallthru
    _

</llo_original>
